<compile_context>
chip_gen: v5e
topology: v5e:2x2
jax: 0.10.0
libtpu: 0.0.40
codegen_flags: <defaults>
</compile_context>

<pallas_src>
import math
import functools

import jax
import jax.numpy as jnp
from jax.experimental import pallas as pl
from jax.experimental.pallas import tpu as pltpu


# --------------------------- tiling helper -----------------------------------

def _pick_tile(dim, cap, mult):
    """Largest tile <= cap that divides dim and is a multiple of `mult`
    (or the full dim when dim <= cap / no divisor exists)."""
    if dim <= cap:
        return dim
    t = (cap // mult) * mult
    while t >= mult:
        if dim % t == 0:
            return t
        t -= mult
    return dim  # fallback: full dim


# --------------------------- Pallas kernels ----------------------------------

def _linear_kernel(*refs, activation, has_bias):
    """Tiled  out = act(x @ W (+ b))  with an f32 accumulator over the K grid axis."""
    if has_bias:
        x_ref, w_ref, b_ref, o_ref, acc_ref = refs
    else:
        x_ref, w_ref, o_ref, acc_ref = refs
        b_ref = None

    @pl.when(pl.program_id(2) == 0)
    def _():
        acc_ref[...] = jnp.zeros_like(acc_ref)

    acc_ref[...] += jnp.dot(x_ref[...], w_ref[...],
                            preferred_element_type=jnp.float32)

    @pl.when(pl.program_id(2) == pl.num_programs(2) - 1)
    def _():
        y = acc_ref[...]
        if b_ref is not None:
            y = y + b_ref[...]
        if activation == "relu":
            y = jnp.maximum(y, 0.0)
        o_ref[...] = y.astype(o_ref.dtype)


def linear(x, w, b=None, activation=None, out_dtype=None,
           tm_cap=256, tn_cap=256, tk_cap=128):
    """x: (M, K) @ w: (K, N) (+ b) -> (M, N).  bf16 operands, f32 accumulation."""
    M, Kd = x.shape
    N = w.shape[1]
    out_dtype = out_dtype if out_dtype is not None else x.dtype
    tm = _pick_tile(M, tm_cap, 8)
    tn = _pick_tile(N, tn_cap, 128)
    tk = _pick_tile(Kd, tk_cap, 128)

    in_specs = [pl.BlockSpec((tm, tk), lambda i, j, k: (i, k)),
                pl.BlockSpec((tk, tn), lambda i, j, k: (k, j))]
    args = [x, w]
    if b is not None:
        in_specs.append(pl.BlockSpec((1, tn), lambda i, j, k: (0, j)))
        args.append(b.reshape(1, N).astype(jnp.float32))

    return pl.pallas_call(
        functools.partial(_linear_kernel, activation=activation,
                          has_bias=b is not None),
        out_shape=jax.ShapeDtypeStruct((M, N), out_dtype),
        grid=(M // tm, N // tn, Kd // tk),
        in_specs=in_specs,
        out_specs=pl.BlockSpec((tm, tn), lambda i, j, k: (i, j)),
        scratch_shapes=[pltpu.VMEM((tm, tn), jnp.float32)],
        compiler_params=pltpu.CompilerParams(
            dimension_semantics=("parallel", "parallel", "arbitrary")),
    )(*args)


def _linear_res_ln_kernel(*refs, has_bias, eps):
    """out = LayerNorm(residual + x @ W (+ b)) * gamma + beta  (fused epilogue)."""
    if has_bias:
        x_ref, w_ref, b_ref, r_ref, g_ref, bt_ref, o_ref, acc_ref = refs
    else:
        x_ref, w_ref, r_ref, g_ref, bt_ref, o_ref, acc_ref = refs
        b_ref = None

    @pl.when(pl.program_id(1) == 0)
    def _():
        acc_ref[...] = jnp.zeros_like(acc_ref)

    acc_ref[...] += jnp.dot(x_ref[...], w_ref[...],
                            preferred_element_type=jnp.float32)

    @pl.when(pl.program_id(1) == pl.num_programs(1) - 1)
    def _():
        y = acc_ref[...]
        if b_ref is not None:
            y = y + b_ref[...]
        y = y + r_ref[...].astype(jnp.float32)
        mean = jnp.mean(y, axis=-1, keepdims=True)
        var = jnp.mean((y - mean) ** 2, axis=-1, keepdims=True)
        yn = (y - mean) * jax.lax.rsqrt(var + eps)
        o_ref[...] = (yn * g_ref[...] + bt_ref[...]).astype(o_ref.dtype)


def linear_residual_layernorm(x, w, residual, gamma, beta, b=None, eps=1e-5,
                              out_dtype=None, tm_cap=256, tk_cap=128):
    """Fused  LN(residual + x @ W (+ b)).  Output (feature) dim kept whole per block."""
    M, Kd = x.shape
    N = w.shape[1]
    out_dtype = out_dtype if out_dtype is not None else residual.dtype
    tm = _pick_tile(M, tm_cap, 8)
    tk = _pick_tile(Kd, tk_cap, 128)

    in_specs = [pl.BlockSpec((tm, tk), lambda i, k: (i, k)),
                pl.BlockSpec((tk, N), lambda i, k: (k, 0))]
    args = [x, w]
    if b is not None:
        in_specs.append(pl.BlockSpec((1, N), lambda i, k: (0, 0)))
        args.append(b.reshape(1, N).astype(jnp.float32))
    in_specs += [pl.BlockSpec((tm, N), lambda i, k: (i, 0)),
                 pl.BlockSpec((1, N), lambda i, k: (0, 0)),
                 pl.BlockSpec((1, N), lambda i, k: (0, 0))]
    args += [residual,
             gamma.reshape(1, N).astype(jnp.float32),
             beta.reshape(1, N).astype(jnp.float32)]

    return pl.pallas_call(
        functools.partial(_linear_res_ln_kernel, has_bias=b is not None, eps=eps),
        out_shape=jax.ShapeDtypeStruct((M, N), out_dtype),
        grid=(M // tm, Kd // tk),
        in_specs=in_specs,
        out_specs=pl.BlockSpec((tm, N), lambda i, k: (i, 0)),
        scratch_shapes=[pltpu.VMEM((tm, N), jnp.float32)],
        compiler_params=pltpu.CompilerParams(
            dimension_semantics=("parallel", "arbitrary")),
    )(*args)


def _attn_kernel(qkv_ref, o_ref, *, H, K, S):
    """All H heads of one batch element. qkv block (S, 3*H*K), out block (S, H*K).
    Causal mask generated in-kernel; q was pre-scaled by 1/sqrt(K)."""
    HK = H * K
    qkv = qkv_ref[...]                                   # (S, 3*H*K) bf16
    rows = jax.lax.broadcasted_iota(jnp.int32, (S, S), 0)
    cols = jax.lax.broadcasted_iota(jnp.int32, (S, S), 1)
    causal = rows >= cols                                # mask[i,j]=keep if i>=j
    outs = []
    for h in range(H):
        q = qkv[:, h * K:(h + 1) * K]
        k = qkv[:, HK + h * K:HK + (h + 1) * K]
        v = qkv[:, 2 * HK + h * K:2 * HK + (h + 1) * K]
        s = jax.lax.dot_general(q, k, (((1,), (1,)), ((), ())),
                                preferred_element_type=jnp.float32)   # (S, S)
        s = jnp.where(causal, s, -1e30)
        s = s - jnp.max(s, axis=-1, keepdims=True)
        e = jnp.exp(s)
        p = e * pl.reciprocal(jnp.sum(e, axis=-1, keepdims=True), approx=True)
        outs.append(jnp.dot(p.astype(v.dtype), v,
                            preferred_element_type=jnp.float32))      # (S, K)
    o_ref[...] = jnp.concatenate(outs, axis=-1).astype(o_ref.dtype)   # lane-dense store


def attention(qkv2d, S, B, H, K, out_dtype):
    """qkv2d: (S, B*3*H*K) laid out [b][q|k|v][h][k]; returns (S, B*H*K)."""
    HK = H * K
    return pl.pallas_call(
        functools.partial(_attn_kernel, H=H, K=K, S=S),
        out_shape=jax.ShapeDtypeStruct((S, B * HK), out_dtype),
        grid=(B,),
        in_specs=[pl.BlockSpec((S, 3 * HK), lambda b: (0, b))],
        out_specs=pl.BlockSpec((S, HK), lambda b: (0, b)),
        compiler_params=pltpu.CompilerParams(dimension_semantics=("parallel",)),
    )(qkv2d)


def _embed_kernel(x_ref, p_ref, o_ref, *, scale):
    # relu(word_emb * sqrt(D) + pos_emb), dropout_io = 0
    o_ref[...] = jnp.maximum(x_ref[...] * scale + p_ref[...][:, None, :],
                             0.0).astype(o_ref.dtype)


def embed_prologue(x, pos, scale, out_dtype):
    S, B, D = x.shape
    ts = _pick_tile(S, 256, 8)
    return pl.pallas_call(
        functools.partial(_embed_kernel, scale=scale),
        out_shape=jax.ShapeDtypeStruct((S, B, D), out_dtype),
        grid=(S // ts,),
        in_specs=[pl.BlockSpec((ts, B, D), lambda i: (i, 0, 0)),
                  pl.BlockSpec((ts, D), lambda i: (i, 0))],
        out_specs=pl.BlockSpec((ts, B, D), lambda i: (i, 0, 0)),
        compiler_params=pltpu.CompilerParams(dimension_semantics=("parallel",)),
    )(x, pos)


# --------------------------- parameters --------------------------------------

def init_params(key, *, vocab, seq_len, D, K, H, F, L):
    keys = jax.random.split(key, 4 + L)

    def n(k, shape):
        return (0.02 * jax.random.normal(k, shape)).astype(jnp.float32)

    params = {
        "word_emb": n(keys[0], (vocab, D)),
        "pos_emb": n(keys[1], (seq_len, D)),
        "fc1_w": n(keys[2], (D, D)), "fc1_b": jnp.zeros((D,), jnp.float32),
        "head_w": n(keys[3], (D, vocab)),
        "head_b": jnp.zeros((vocab,), jnp.float32),     # self.bias (init 0)
        "layers": [],
    }
    for i in range(L):
        lk = jax.random.split(keys[4 + i], 6)
        params["layers"].append({
            "wq": n(lk[0], (D, H * K)), "wk": n(lk[1], (D, H * K)),
            "wv": n(lk[2], (D, H * K)), "wc": n(lk[3], (H * K, D)),
            "w1": n(lk[4], (D, F)), "b1": jnp.zeros((F,), jnp.float32),
            "w2": n(lk[5], (F, D)), "b2": jnp.zeros((D,), jnp.float32),
            "ln1_g": jnp.ones((D,), jnp.float32), "ln1_b": jnp.zeros((D,), jnp.float32),
            "ln2_g": jnp.ones((D,), jnp.float32), "ln2_b": jnp.zeros((D,), jnp.float32),
        })
    return params


def prepare_params(params, K, dtype=jnp.bfloat16):
    """Kernel-ready params: bf16 matmul weights, wq|wk|wv fused, 1/sqrt(K) folded into wq."""
    inv_sqrt_k = 1.0 / math.sqrt(K)
    pp = {
        "word_emb": params["word_emb"], "pos_emb": params["pos_emb"],
        "fc1_w": params["fc1_w"].astype(dtype), "fc1_b": params["fc1_b"],
        "head_w": params["head_w"].astype(dtype), "head_b": params["head_b"],
        "layers": [],
    }
    for lp in params["layers"]:
        w_qkv = jnp.concatenate(
            [lp["wq"] * inv_sqrt_k, lp["wk"], lp["wv"]], axis=1).astype(dtype)
        pp["layers"].append({
            "w_qkv": w_qkv, "wc": lp["wc"].astype(dtype),
            "w1": lp["w1"].astype(dtype), "b1": lp["b1"],
            "w2": lp["w2"].astype(dtype), "b2": lp["b2"],
            "ln1_g": lp["ln1_g"], "ln1_b": lp["ln1_b"],
            "ln2_g": lp["ln2_g"], "ln2_b": lp["ln2_b"],
        })
    return pp


# --------------------------- forward (Pallas) ---------------------------------

def forward_pallas(pp, tokens, H, K, act_dtype=jnp.bfloat16):
    S, B = tokens.shape
    D = pp["word_emb"].shape[1]
    V = pp["head_w"].shape[1]
    HK = H * K

    # embedding gathers stay in plain JAX (glue)
    # TODO(synk): the embedding gather has no clean simple Pallas equivalent here.
    x = pp["word_emb"][tokens]                     # (S, B, D) f32
    pos = pp["pos_emb"][:S]                        # (S, D)    f32

    e = embed_prologue(x, pos, math.sqrt(D), act_dtype)            # relu(x*sqrt(D)+pos)
    z = linear(e.reshape(S * B, D), pp["fc1_w"], pp["fc1_b"],
               out_dtype=act_dtype)                                # fc1

    for lp in pp["layers"]:
        qkv = linear(z, lp["w_qkv"], out_dtype=act_dtype)          # fused q|k|v, no bias
        u = attention(qkv.reshape(S, B * 3 * HK), S, B, H, K, act_dtype)   # (S, B*HK)
        u = u.reshape(S * B, HK)
        u = linear_residual_layernorm(u, lp["wc"], z,              # LN1(z + wc(attn))
                                      lp["ln1_g"], lp["ln1_b"], out_dtype=act_dtype)
        h = linear(u, lp["w1"], lp["b1"], activation="relu",
                   out_dtype=act_dtype)                            # relu(w1(u)+b1)
        z = linear_residual_layernorm(h, lp["w2"], u,              # LN2(u + w2(h)+b2)
                                      lp["ln2_g"], lp["ln2_b"], b=lp["b2"],
                                      out_dtype=act_dtype)

    logits = linear(z, pp["head_w"], pp["head_b"], out_dtype=jnp.float32)  # head + bias
    return logits.reshape(S, B, V)


# --------------------------- reference (matched precision) --------------------

def forward_ref(pp, tokens, H, K, act_dtype=jnp.bfloat16):
    S, B = tokens.shape
    D = pp["word_emb"].shape[1]
    V = pp["head_w"].shape[1]
    HK = H * K

    def mm(x, w):
        return jax.lax.dot_general(x.astype(w.dtype), w, (((1,), (0,)), ((), ())),
                                   preferred_element_type=jnp.float32)

    def ln(y, g, b, eps=1e-5):
        m = jnp.mean(y, -1, keepdims=True)
        v = jnp.mean((y - m) ** 2, -1, keepdims=True)
        return (y - m) * jax.lax.rsqrt(v + eps) * g + b

    x = pp["word_emb"][tokens]
    p = pp["pos_emb"][:S][:, None, :]
    e = jnp.maximum(x * math.sqrt(D) + p, 0.0).astype(act_dtype).reshape(S * B, D)
    z = (mm(e, pp["fc1_w"]) + pp["fc1_b"]).astype(act_dtype)

    causal = jnp.arange(S)[:, None] >= jnp.arange(S)[None, :]

    for lp in pp["layers"]:
        qkv = mm(z, lp["w_qkv"]).astype(act_dtype).reshape(S, B, 3 * HK)
        per_batch = []
        for b in range(B):
            qkv_b = qkv[:, b, :]
            heads = []
            for h in range(H):
                q = qkv_b[:, h * K:(h + 1) * K]
                k = qkv_b[:, HK + h * K:HK + (h + 1) * K]
                v = qkv_b[:, 2 * HK + h * K:2 * HK + (h + 1) * K]
                s = jax.lax.dot_general(q, k, (((1,), (1,)), ((), ())),
                                        preferred_element_type=jnp.float32)
                s = jnp.where(causal, s, -1e30)
                s = s - jnp.max(s, -1, keepdims=True)
                es = jnp.exp(s)
                pr = es / jnp.sum(es, -1, keepdims=True)
                heads.append(jnp.dot(pr.astype(v.dtype), v,
                                     preferred_element_type=jnp.float32))
            per_batch.append(jnp.concatenate(heads, -1))
        u = jnp.stack(per_batch, axis=1).astype(act_dtype).reshape(S * B, HK)
        u = ln(mm(u, lp["wc"]) + z.astype(jnp.float32),
               lp["ln1_g"], lp["ln1_b"]).astype(act_dtype)
        hh = jnp.maximum(mm(u, lp["w1"]) + lp["b1"], 0.0).astype(act_dtype)
        z = ln(mm(hh, lp["w2"]) + lp["b2"] + u.astype(jnp.float32),
               lp["ln2_g"], lp["ln2_b"]).astype(act_dtype)

    logits = mm(z, pp["head_w"]) + pp["head_b"]
    return logits.reshape(S, B, V)


# --------------------------------- main ---------------------------------------

if __name__ == "__main__":
    SEQ, BATCH = 16, 4
    VOCAB, D, K, H, F, L = 1024, 256, 64, 4, 512, 2    # small but exercises tiling

    key = jax.random.PRNGKey(0)
    pkey, tkey = jax.random.split(key)
    raw = init_params(pkey, vocab=VOCAB, seq_len=SEQ, D=D, K=K, H=H, F=F, L=L)
    pp = prepare_params(raw, K)
    tokens = jax.random.randint(tkey, (SEQ, BATCH), 0, VOCAB, dtype=jnp.int32)

    out = forward_pallas(pp, tokens, H, K)
    out = jax.block_until_ready(out)
    assert out.shape == (SEQ, BATCH, VOCAB)
    assert bool(jnp.all(jnp.isfinite(out)))

    ref = forward_ref(pp, tokens, H, K)
    max_err = float(jnp.max(jnp.abs(out - ref)))
    assert jnp.allclose(out, ref, atol=1e-2, rtol=1e-2), f"max_err={max_err}"

    print("KERNEL_OK")
</pallas_src>

<mosaic_0001>
module attributes {stable_mosaic.version = 11 : i64} {
  func.func @_embed_kernel(%arg0: i32, %arg1: memref<16x4x256xf32, #tpu.memory_space<vmem>>, %arg2: memref<16x256xf32, #tpu.memory_space<vmem>>, %arg3: memref<16x4x256xbf16, #tpu.memory_space<vmem>>) attributes {dimension_semantics = [#tpu.dimension_semantics<parallel>], iteration_bounds = array<i64: 1>, scalar_prefetch = 0 : i64, scratch_operands = 0 : i64, tpu.core_type = #tpu.core_type<tc>, window_params = [{transform_indices = @transform_0, window_bounds = array<i64: 16, 4, 256>}, {transform_indices = @transform_1, window_bounds = array<i64: 16, 256>}, {transform_indices = @transform_2, window_bounds = array<i64: 16, 4, 256>}]} {
    %c0 = arith.constant 0 : index
    %c0_0 = arith.constant 0 : index
    %c0_1 = arith.constant 0 : index
    %0 = vector.load %arg1[%c0, %c0_0, %c0_1] : memref<16x4x256xf32, #tpu.memory_space<vmem>>, vector<16x4x256xf32>
    %cst = arith.constant 1.600000e+01 : f32
    %1 = vector.broadcast %cst : f32 to vector<16x4x256xf32>
    %2 = arith.mulf %0, %1 : vector<16x4x256xf32>
    %c0_2 = arith.constant 0 : index
    %c0_3 = arith.constant 0 : index
    %3 = vector.load %arg2[%c0_2, %c0_3] : memref<16x256xf32, #tpu.memory_space<vmem>>, vector<16x256xf32>
    %4 = vector.shape_cast %3 : vector<16x256xf32> to vector<16x1x256xf32>
    %5 = vector.broadcast %4 : vector<16x1x256xf32> to vector<16x4x256xf32>
    %6 = arith.addf %2, %5 : vector<16x4x256xf32>
    %cst_4 = arith.constant 0.000000e+00 : f32
    %7 = vector.broadcast %cst_4 : f32 to vector<16x4x256xf32>
    %8 = arith.maximumf %6, %7 : vector<16x4x256xf32>
    %9 = arith.truncf %8 : vector<16x4x256xf32> to vector<16x4x256xbf16>
    %c0_5 = arith.constant 0 : index
    %c0_6 = arith.constant 0 : index
    %c0_7 = arith.constant 0 : index
    %10 = vector.load %arg3[%c0_5, %c0_6, %c0_7] : memref<16x4x256xbf16, #tpu.memory_space<vmem>>, vector<16x4x256xbf16>
    tpu.vector_store %arg3[%c0_5, %c0_6, %c0_7], %9 {strides = array<i32>} : memref<16x4x256xbf16, #tpu.memory_space<vmem>>, vector<16x4x256xbf16>,
    return
  }
  func.func @transform_0(%arg0: i32) -> (i32, i32, i32) {
    %c0_i32 = arith.constant 0 : i32
    %c0_i32_0 = arith.constant 0 : i32
    %c0_i32_1 = arith.constant 0 : i32
    return %arg0, %c0_i32, %c0_i32_0 : i32, i32, i32
  }
  func.func @transform_1(%arg0: i32) -> (i32, i32) {
    %c0_i32 = arith.constant 0 : i32
    %c0_i32_0 = arith.constant 0 : i32
    return %arg0, %c0_i32 : i32, i32
  }
  func.func @transform_2(%arg0: i32) -> (i32, i32, i32) {
    %c0_i32 = arith.constant 0 : i32
    %c0_i32_0 = arith.constant 0 : i32
    %c0_i32_1 = arith.constant 0 : i32
    return %arg0, %c0_i32, %c0_i32_0 : i32, i32, i32
  }
}

</mosaic_0001>

<llo_original>
// kernel: tpu_custom_call.1
$region0: #{tpu_custom_call.1}
  #allocation0 [shape = 'u32[]', space=smem, size = 0x4, offset = 0x4, fixed_abs, tag = 'smem constant byte address 0x4 - core index']
  #allocation1 [shape = 'u32[72,128]{1,0:T(1,128)}', space=vmem, size = 0x9000, scoped, tag = 'internal scratch']
  %s0 = inlined_call_operand.hbm [shape: f32[16,4,256], index: 0, kind: input, shape index: {}]
  %s1 = inlined_call_operand.hbm [shape: f32[16,256], index: 1, kind: input, shape index: {}]
  %s2 = inlined_call_operand.hbm [shape: bf16[16,4,256], index: 2, kind: output, shape index: {}]
  %s3 = sld [smem:[#allocation0]]
  $region26: #{tpu_custom_call.1} parent=0
    _
  %s5 = ssub.s32 1, %s3
  %s6 = scalar_select 0, %s5, %s3
  $region1: #{tpu_custom_call.1} parent=0
    #allocation2 [shape = 'u8[65536]{0}', space=vmem, size = 0x10000, scoped, tag = 'input window, operand 0, single buffered']
    #allocation3 [shape = 's32[1]{0}', space=sflag, size = 0x4, scoped, tag = 'scoped memory for tpu_custom_call.1']
    #allocation4 [shape = 's32[1]{0}', space=sflag, size = 0x4, scoped, tag = 'scoped memory for tpu_custom_call.1']
    #allocation5 [shape = 'u8[16384]{0}', space=vmem, size = 0x4000, scoped, tag = 'input window, operand 1, single buffered']
    #allocation6 [shape = 's32[1]{0}', space=sflag, size = 0x4, scoped, tag = 'scoped memory for tpu_custom_call.1']
    #allocation7 [shape = 'u8[32768]{0}', space=vmem, size = 0x8000, scoped, tag = 'output window, operand 0, single buffered']
    %7 = vsyncpa [#allocation3], 0
    %8 = vsyncpa [#allocation6], 0
    %9 = vsyncpa [#allocation4], 0
    // Predicated region
    $region2: #{tpu_custom_call.1} parent=1 // pred_check
      _
    $region3: #{tpu_custom_call.1} parent=1 // pred_check_branch
      %11 = sbr.rel (0) target = $region5
    $region4: #{tpu_custom_call.1} parent=1 // pred_region
      %13 = vsyncadd [#allocation3], 0
      %s14 = sshll.u32 %s0, 4
      %s15 = int_to_ptr.hbm [resolvable:$true] %s14
      %s16 = sshll.u32 [#allocation2], 4
      %s17 = int_to_ptr.vmem [resolvable:$true] %s16
      %22 = dma.hbm_to_vmem [thread:$0]  %s15, 2048, %s17, [#allocation3], 128, 128, 8
    $region5: #{tpu_custom_call.1} parent=1 // pred_fallthru
      _
    // Predicated region
    $region6: #{tpu_custom_call.1} parent=1 // pred_check
      _
    $region7: #{tpu_custom_call.1} parent=1 // pred_check_branch
      %24 = sbr.rel (0) target = $region9
    $region8: #{tpu_custom_call.1} parent=1 // pred_region
      %26 = vsyncadd [#allocation6], 0
      %s27 = sshll.u32 %s1, 4
      %s28 = int_to_ptr.hbm [resolvable:$true] %s27
      %s29 = sshll.u32 [#allocation5], 4
      %s30 = int_to_ptr.vmem [resolvable:$true] %s29
      %35 = dma.hbm_to_vmem [thread:$0]  %s28, 512, %s30, [#allocation6], 256, 256, 16
    $region9: #{tpu_custom_call.1} parent=1 // pred_fallthru
      _
    // Predicated region
    $region10: #{tpu_custom_call.1} parent=1 // pred_check
      _
    $region11: #{tpu_custom_call.1} parent=1 // pred_check_branch
      %37 = sbr.rel (0) target = $region13
    $region12: #{tpu_custom_call.1} parent=1 // pred_region
      %39 = dma.done [#allocation3], 2048
    $region13: #{tpu_custom_call.1} parent=1 // pred_fallthru
      _
    // Predicated region
    $region14: #{tpu_custom_call.1} parent=1 // pred_check
      _
    $region15: #{tpu_custom_call.1} parent=1 // pred_check_branch
      %41 = sbr.rel (0) target = $region17
    $region16: #{tpu_custom_call.1} parent=1 // pred_region
      %43 = dma.done [#allocation6], 512
    $region17: #{tpu_custom_call.1} parent=1 // pred_fallthru
      _
    %v44 = vld [vmem:[#allocation2] sm:$0xff]
    %v45 = vld [vmem:[#allocation2 + $0x8] sm:$0xff]
    %v46 = vld [vmem:[#allocation2 + $0x10] sm:$0xff]
    %v47 = vld [vmem:[#allocation2 + $0x18] sm:$0xff]
    %v48 = vld [vmem:[#allocation2 + $0x20] sm:$0xff]
    %v49 = vld [vmem:[#allocation2 + $0x28] sm:$0xff]
    %v50 = vld [vmem:[#allocation2 + $0x30] sm:$0xff]
    %v51 = vld [vmem:[#allocation2 + $0x38] sm:$0xff]
    %v52 = vld [vmem:[#allocation2 + $0x40] sm:$0xff]
    %v53 = vld [vmem:[#allocation2 + $0x48] sm:$0xff]
    %v54 = vld [vmem:[#allocation2 + $0x50] sm:$0xff]
    %v55 = vld [vmem:[#allocation2 + $0x58] sm:$0xff]
    %v56 = vld [vmem:[#allocation2 + $0x60] sm:$0xff]
    %v57 = vld [vmem:[#allocation2 + $0x68] sm:$0xff]
    %v58 = vld [vmem:[#allocation2 + $0x70] sm:$0xff]
    %v59 = vld [vmem:[#allocation2 + $0x78] sm:$0xff]
    %v60 = vmul.f32 %v44, 16.0
    %v61 = vmul.f32 %v45, 16.0
    %v62 = vmul.f32 %v46, 16.0
    %v63 = vmul.f32 %v47, 16.0
    %v64 = vmul.f32 %v48, 16.0
    %v65 = vmul.f32 %v49, 16.0
    %v66 = vmul.f32 %v50, 16.0
    %v67 = vmul.f32 %v51, 16.0
    %v68 = vmul.f32 %v52, 16.0
    %v69 = vmul.f32 %v53, 16.0
    %v70 = vmul.f32 %v54, 16.0
    %v71 = vmul.f32 %v55, 16.0
    %v72 = vmul.f32 %v56, 16.0
    %v73 = vmul.f32 %v57, 16.0
    %v74 = vmul.f32 %v58, 16.0
    %v75 = vmul.f32 %v59, 16.0
    %v76 = vld [vmem:[#allocation5] sm:$0xff]
    %v77 = vld [vmem:[#allocation5 + $0x8] sm:$0xff]
    %v78 = vld [vmem:[#allocation5 + $0x10] sm:$0xff]
    %v79 = vld [vmem:[#allocation5 + $0x18] sm:$0xff]
    %v84 = vrot.slane %v77, 7
    %v85 = vrot.slane %v79, 7
    %vm86 = vcmask 1040384
    %v87 = vsel %vm86, %v76, %v84
    %vm88 = vcmask 1041409
    %v89 = vsel %vm88, %v76, %v84
    %v90 = vrot.slane %v89, 1
    %vm91 = vcmask 1042434
    %v92 = vsel %vm91, %v76, %v84
    %v93 = vrot.slane %v92, 2
    %vm94 = vcmask 1043459
    %v95 = vsel %vm94, %v76, %v84
    %v96 = vrot.slane %v95, 3
    %vm97 = vcmask 1044484
    %v98 = vsel %vm97, %v76, %v84
    %v99 = vrot.slane %v98, 4
    %vm100 = vcmask 1045509
    %v101 = vsel %vm100, %v76, %v84
    %v102 = vrot.slane %v101, 5
    %vm103 = vcmask 1046534
    %v104 = vsel %vm103, %v76, %v84
    %v105 = vrot.slane %v104, 6
    %vm106 = vcmask 1046528
    %v107 = vsel %vm106, %v84, %v76
    %v108 = vrot.slane %v107, 7
    %v109 = vsel %vm86, %v78, %v85
    %v110 = vsel %vm88, %v78, %v85
    %v111 = vrot.slane %v110, 1
    %v112 = vsel %vm91, %v78, %v85
    %v113 = vrot.slane %v112, 2
    %v114 = vsel %vm94, %v78, %v85
    %v115 = vrot.slane %v114, 3
    %v116 = vsel %vm97, %v78, %v85
    %v117 = vrot.slane %v116, 4
    %v118 = vsel %vm100, %v78, %v85
    %v119 = vrot.slane %v118, 5
    %v120 = vsel %vm103, %v78, %v85
    %v121 = vrot.slane %v120, 6
    %v122 = vsel %vm106, %v85, %v78
    %v123 = vrot.slane %v122, 7
    %v124 = vperm.slane %v87, 0
    %v125 = vperm.slane %v87, 1
    %v126 = vperm.slane %v90, 0
    %v127 = vperm.slane %v90, 1
    %v128 = vperm.slane %v93, 0
    %v129 = vperm.slane %v93, 1
    %v130 = vperm.slane %v96, 0
    %v131 = vperm.slane %v96, 1
    %v132 = vperm.slane %v99, 0
    %v133 = vperm.slane %v99, 1
    %v134 = vperm.slane %v102, 0
    %v135 = vperm.slane %v102, 1
    %v136 = vperm.slane %v105, 0
    %v137 = vperm.slane %v105, 1
    %v138 = vperm.slane %v108, 0
    %v139 = vperm.slane %v108, 1
    %v140 = vperm.slane %v109, 0
    %v141 = vperm.slane %v109, 1
    %v142 = vperm.slane %v111, 0
    %v143 = vperm.slane %v111, 1
    %v144 = vperm.slane %v113, 0
    %v145 = vperm.slane %v113, 1
    %v146 = vperm.slane %v115, 0
    %v147 = vperm.slane %v115, 1
    %v148 = vperm.slane %v117, 0
    %v149 = vperm.slane %v117, 1
    %v150 = vperm.slane %v119, 0
    %v151 = vperm.slane %v119, 1
    %v152 = vperm.slane %v121, 0
    %v153 = vperm.slane %v121, 1
    %v154 = vperm.slane %v123, 0
    %v155 = vperm.slane %v123, 1
    %v156 = vrot.slane %v125, 4
    %v157 = vrot.slane %v127, 4
    %v158 = vrot.slane %v129, 4
    %v159 = vrot.slane %v131, 4
    %v160 = vrot.slane %v133, 4
    %v161 = vrot.slane %v135, 4
    %v162 = vrot.slane %v137, 4
    %v163 = vrot.slane %v139, 4
    %v164 = vrot.slane %v141, 4
    %v165 = vrot.slane %v143, 4
    %v166 = vrot.slane %v145, 4
    %v167 = vrot.slane %v147, 4
    %v168 = vrot.slane %v149, 4
    %v169 = vrot.slane %v151, 4
    %v170 = vrot.slane %v153, 4
    %v171 = vrot.slane %v155, 4
    %vm172 = vcmask 1043456
    %v173 = vsel %vm172, %v124, %v156
    %v174 = vsel %vm172, %v126, %v157
    %v175 = vsel %vm172, %v128, %v158
    %v176 = vsel %vm172, %v130, %v159
    %v177 = vsel %vm172, %v132, %v160
    %v178 = vsel %vm172, %v134, %v161
    %v179 = vsel %vm172, %v136, %v162
    %v180 = vsel %vm172, %v138, %v163
    %v181 = vsel %vm172, %v140, %v164
    %v182 = vsel %vm172, %v142, %v165
    %v183 = vsel %vm172, %v144, %v166
    %v184 = vsel %vm172, %v146, %v167
    %v185 = vsel %vm172, %v148, %v168
    %v186 = vsel %vm172, %v150, %v169
    %v187 = vsel %vm172, %v152, %v170
    %v188 = vsel %vm172, %v154, %v171
    %v205 = vadd.f32 %v60, %v173
    %v206 = vadd.f32 %v61, %v174
    %v207 = vadd.f32 %v62, %v175
    %v208 = vadd.f32 %v63, %v176
    %v209 = vadd.f32 %v64, %v177
    %v210 = vadd.f32 %v65, %v178
    %v211 = vadd.f32 %v66, %v179
    %v212 = vadd.f32 %v67, %v180
    %v213 = vadd.f32 %v68, %v181
    %v214 = vadd.f32 %v69, %v182
    %v215 = vadd.f32 %v70, %v183
    %v216 = vadd.f32 %v71, %v184
    %v217 = vadd.f32 %v72, %v185
    %v218 = vadd.f32 %v73, %v186
    %v219 = vadd.f32 %v74, %v187
    %v220 = vadd.f32 %v75, %v188
    %v221 = vmax.f32 %v205, 0.0
    %v222 = vmax.f32 %v206, 0.0
    %v223 = vmax.f32 %v207, 0.0
    %v224 = vmax.f32 %v208, 0.0
    %v225 = vmax.f32 %v209, 0.0
    %v226 = vmax.f32 %v210, 0.0
    %v227 = vmax.f32 %v211, 0.0
    %v228 = vmax.f32 %v212, 0.0
    %v229 = vmax.f32 %v213, 0.0
    %v230 = vmax.f32 %v214, 0.0
    %v231 = vmax.f32 %v215, 0.0
    %v232 = vmax.f32 %v216, 0.0
    %v233 = vmax.f32 %v217, 0.0
    %v234 = vmax.f32 %v218, 0.0
    %v235 = vmax.f32 %v219, 0.0
    %v236 = vmax.f32 %v220, 0.0
    %253 = vst [vmem:[#allocation1] ss:$2 sm:$0xff] %v221
    %v254 = vld.sshfl [vmem:[#allocation1] sm:$0xff pattern:$0x75316420]
    %v255 = vld.sshfl [vmem:[#allocation1 + $0x8] sm:$0xff pattern:$0x75316420]
    %s256 = scalar_lea.vmem [#allocation1], 16
    %257 = vst [vmem:[%s256] ss:$2 sm:$0xff] %v222
    %v258 = vld.sshfl [vmem:[#allocation1 + $0x10] sm:$0xff pattern:$0x75316420]
    %v259 = vld.sshfl [vmem:[#allocation1 + $0x18] sm:$0xff pattern:$0x75316420]
    %s260 = scalar_lea.vmem [#allocation1], 32
    %261 = vst [vmem:[%s260] ss:$2 sm:$0xff] %v223
    %v262 = vld.sshfl [vmem:[#allocation1 + $0x20] sm:$0xff pattern:$0x75316420]
    %v263 = vld.sshfl [vmem:[#allocation1 + $0x28] sm:$0xff pattern:$0x75316420]
    %s264 = scalar_lea.vmem [#allocation1], 48
    %265 = vst [vmem:[%s264] ss:$2 sm:$0xff] %v224
    %v266 = vld.sshfl [vmem:[#allocation1 + $0x30] sm:$0xff pattern:$0x75316420]
    %v267 = vld.sshfl [vmem:[#allocation1 + $0x38] sm:$0xff pattern:$0x75316420]
    %268 = vst [vmem:[#allocation1] ss:$2 sm:$0xff] %v225
    %v269 = vld.sshfl [vmem:[#allocation1] sm:$0xff pattern:$0x75316420]
    %v270 = vld.sshfl [vmem:[#allocation1 + $0x8] sm:$0xff pattern:$0x75316420]
    %271 = vst [vmem:[%s256] ss:$2 sm:$0xff] %v226
    %v272 = vld.sshfl [vmem:[#allocation1 + $0x10] sm:$0xff pattern:$0x75316420]
    %v273 = vld.sshfl [vmem:[#allocation1 + $0x18] sm:$0xff pattern:$0x75316420]
    %274 = vst [vmem:[%s260] ss:$2 sm:$0xff] %v227
    %v275 = vld.sshfl [vmem:[#allocation1 + $0x20] sm:$0xff pattern:$0x75316420]
    %v276 = vld.sshfl [vmem:[#allocation1 + $0x28] sm:$0xff pattern:$0x75316420]
    %277 = vst [vmem:[%s264] ss:$2 sm:$0xff] %v228
    %v278 = vld.sshfl [vmem:[#allocation1 + $0x30] sm:$0xff pattern:$0x75316420]
    %v279 = vld.sshfl [vmem:[#allocation1 + $0x38] sm:$0xff pattern:$0x75316420]
    %280 = vst [vmem:[#allocation1] ss:$2 sm:$0xff] %v229
    %v281 = vld.sshfl [vmem:[#allocation1] sm:$0xff pattern:$0x75316420]
    %v282 = vld.sshfl [vmem:[#allocation1 + $0x8] sm:$0xff pattern:$0x75316420]
    %283 = vst [vmem:[%s256] ss:$2 sm:$0xff] %v230
    %v284 = vld.sshfl [vmem:[#allocation1 + $0x10] sm:$0xff pattern:$0x75316420]
    %v285 = vld.sshfl [vmem:[#allocation1 + $0x18] sm:$0xff pattern:$0x75316420]
    %286 = vst [vmem:[%s260] ss:$2 sm:$0xff] %v231
    %v287 = vld.sshfl [vmem:[#allocation1 + $0x20] sm:$0xff pattern:$0x75316420]
    %v288 = vld.sshfl [vmem:[#allocation1 + $0x28] sm:$0xff pattern:$0x75316420]
    %289 = vst [vmem:[%s264] ss:$2 sm:$0xff] %v232
    %v290 = vld.sshfl [vmem:[#allocation1 + $0x30] sm:$0xff pattern:$0x75316420]
    %v291 = vld.sshfl [vmem:[#allocation1 + $0x38] sm:$0xff pattern:$0x75316420]
    %292 = vst [vmem:[#allocation1] ss:$2 sm:$0xff] %v233
    %v293 = vld.sshfl [vmem:[#allocation1] sm:$0xff pattern:$0x75316420]
    %v294 = vld.sshfl [vmem:[#allocation1 + $0x8] sm:$0xff pattern:$0x75316420]
    %295 = vst [vmem:[%s256] ss:$2 sm:$0xff] %v234
    %v296 = vld.sshfl [vmem:[#allocation1 + $0x10] sm:$0xff pattern:$0x75316420]
    %v297 = vld.sshfl [vmem:[#allocation1 + $0x18] sm:$0xff pattern:$0x75316420]
    %298 = vst [vmem:[%s260] ss:$2 sm:$0xff] %v235
    %v299 = vld.sshfl [vmem:[#allocation1 + $0x20] sm:$0xff pattern:$0x75316420]
    %v300 = vld.sshfl [vmem:[#allocation1 + $0x28] sm:$0xff pattern:$0x75316420]
    %301 = vst [vmem:[%s264] ss:$2 sm:$0xff] %v236
    %v302 = vld.sshfl [vmem:[#allocation1 + $0x30] sm:$0xff pattern:$0x75316420]
    %v303 = vld.sshfl [vmem:[#allocation1 + $0x38] sm:$0xff pattern:$0x75316420]
    %v336 = vpack.c.bf16 %v255, %v254
    %v337 = vpack.c.bf16 %v259, %v258
    %v338 = vpack.c.bf16 %v263, %v262
    %v339 = vpack.c.bf16 %v267, %v266
    %v340 = vpack.c.bf16 %v270, %v269
    %v341 = vpack.c.bf16 %v273, %v272
    %v342 = vpack.c.bf16 %v276, %v275
    %v343 = vpack.c.bf16 %v279, %v278
    %v344 = vpack.c.bf16 %v282, %v281
    %v345 = vpack.c.bf16 %v285, %v284
    %v346 = vpack.c.bf16 %v288, %v287
    %v347 = vpack.c.bf16 %v291, %v290
    %v348 = vpack.c.bf16 %v294, %v293
    %v349 = vpack.c.bf16 %v297, %v296
    %v350 = vpack.c.bf16 %v300, %v299
    %v351 = vpack.c.bf16 %v303, %v302
    %v368 = vrot.slane %v336, 2
    %v369 = vrot.slane %v337, 2
    %v370 = vrot.slane %v338, 2
    %v371 = vrot.slane %v339, 2
    %v372 = vrot.slane %v340, 2
    %v373 = vrot.slane %v341, 2
    %v374 = vrot.slane %v342, 2
    %v375 = vrot.slane %v343, 2
    %v376 = vrot.slane %v344, 2
    %v377 = vrot.slane %v345, 2
    %v378 = vrot.slane %v346, 2
    %v379 = vrot.slane %v347, 2
    %v380 = vrot.slane %v348, 2
    %v381 = vrot.slane %v349, 2
    %v382 = vrot.slane %v350, 2
    %v383 = vrot.slane %v351, 2
    %vm384 = vcmask 1041408
    %v387 = vsel %vm384, %v336, %v368
    %v390 = vsel %vm384, %v337, %v369
    %v393 = vsel %vm384, %v338, %v370
    %v396 = vsel %vm384, %v339, %v371
    %v399 = vsel %vm384, %v340, %v372
    %v402 = vsel %vm384, %v341, %v373
    %v405 = vsel %vm384, %v342, %v374
    %v408 = vsel %vm384, %v343, %v375
    %v411 = vsel %vm384, %v344, %v376
    %v414 = vsel %vm384, %v345, %v377
    %v417 = vsel %vm384, %v346, %v378
    %v420 = vsel %vm384, %v347, %v379
    %v423 = vsel %vm384, %v348, %v380
    %v426 = vsel %vm384, %v349, %v381
    %v429 = vsel %vm384, %v350, %v382
    %v432 = vsel %vm384, %v351, %v383
    %449 = vst [vmem:[#allocation7] sm:$0xf] %v387
    %450 = vst [vmem:[#allocation7 + $0x4] sm:$0xf] %v390
    %451 = vst [vmem:[#allocation7 + $0x8] sm:$0xf] %v393
    %452 = vst [vmem:[#allocation7 + $0xc] sm:$0xf] %v396
    %453 = vst [vmem:[#allocation7 + $0x10] sm:$0xf] %v399
    %454 = vst [vmem:[#allocation7 + $0x14] sm:$0xf] %v402
    %455 = vst [vmem:[#allocation7 + $0x18] sm:$0xf] %v405
    %456 = vst [vmem:[#allocation7 + $0x1c] sm:$0xf] %v408
    %457 = vst [vmem:[#allocation7 + $0x20] sm:$0xf] %v411
    %458 = vst [vmem:[#allocation7 + $0x24] sm:$0xf] %v414
    %459 = vst [vmem:[#allocation7 + $0x28] sm:$0xf] %v417
    %460 = vst [vmem:[#allocation7 + $0x2c] sm:$0xf] %v420
    %461 = vst [vmem:[#allocation7 + $0x30] sm:$0xf] %v423
    %462 = vst [vmem:[#allocation7 + $0x34] sm:$0xf] %v426
    %463 = vst [vmem:[#allocation7 + $0x38] sm:$0xf] %v429
    %464 = vst [vmem:[#allocation7 + $0x3c] sm:$0xf] %v432
    // Predicated region
    $region18: #{tpu_custom_call.1} parent=1 // pred_check
      _
    $region19: #{tpu_custom_call.1} parent=1 // pred_check_branch
      %466 = sbr.rel (0) target = $region21
    $region20: #{tpu_custom_call.1} parent=1 // pred_region
      %468 = vsyncadd [#allocation4], 0
      %s469 = sshll.u32 [#allocation7], 4
      %s470 = int_to_ptr.vmem [resolvable:$true] %s469
      %s471 = sshll.u32 %s2, 4
      %s472 = int_to_ptr.hbm [resolvable:$true] %s471
      %477 = dma.vmem_to_hbm [thread:$0]  %s470, 1024, %s472, [#allocation4], 64, 64, 4
    $region21: #{tpu_custom_call.1} parent=1 // pred_fallthru
      _
    // Predicated region
    $region22: #{tpu_custom_call.1} parent=1 // pred_check
      _
    $region23: #{tpu_custom_call.1} parent=1 // pred_check_branch
      %479 = sbr.rel (0) target = $region25
    $region24: #{tpu_custom_call.1} parent=1 // pred_region
      %481 = dma.done [#allocation4], 1024
    $region25: #{tpu_custom_call.1} parent=1 // pred_fallthru
      _
    %482 = vsyncpa [#allocation3], 1
    %483 = vsyncpa [#allocation6], 1
    %484 = vsyncpa [#allocation4], 1

</llo_original>
